<compile_context>
chip_gen: v6e
topology: v6e:2x2x1
jax: 0.10.0
libtpu: 0.0.40
codegen_flags: <defaults>
</compile_context>

<pallas_src>
import functools

import jax
import jax.numpy as jnp
from jax import lax
from jax.experimental import pallas as pl
from jax.experimental.pallas import tpu as pltpu

_LANE = 128
_MIB = 1024 * 1024


# --------------------------- planning helpers -------------------------------


def _vmem_capacity_bytes():
    """Physical VMEM per TensorCore (generation-aware, safe fallbacks)."""
    try:
        cap = getattr(pltpu.get_tpu_info(), "vmem_capacity_bytes", None)
        if cap:
            return int(cap)
    except Exception:
        pass
    try:
        kind = jax.devices()[0].device_kind.lower()
        if "v5" in kind or "v6" in kind:
            return 128 * _MIB
    except Exception:
        pass
    return 64 * _MIB  # conservative default (v7x per-TC VMEM)


def _choose_tk(l_pad, c, itemsize, tile_l, budget):
    """Largest lane-aligned divisor of padded L whose (C, TK) tile fits budget."""
    if tile_l is not None and tile_l % _LANE == 0 and l_pad % tile_l == 0:
        return int(tile_l)
    max_tk = max(_LANE, (budget // (c * itemsize)) // _LANE * _LANE)
    tk = min(l_pad, max_tk)
    while l_pad % tk != 0:  # keep the grid exact (no partial blocks)
        tk -= _LANE
    return tk


def _vmem_limit_bytes(c, tr, tk, itemsize, *, num_buffers, has_target, cap):
    """Accurate scoped-VMEM request: real blocks + fixed Mosaic headroom."""
    need = (num_buffers * c * tk * itemsize   # streamed feature tiles
            + 2 * tr * c * 4                  # G output block (double-buffered)
            + tr * c * 4                      # f32 accumulator scratch
            + 2 * 8 * _LANE * 4)              # SSE block + slack
    if has_target:
        need += 2 * c * c * 4                 # target block (double-buffered)
    headroom = 4 * _MIB                       # Mosaic internal scratch
    return int(min(max(need + headroom, 32 * _MIB), cap))


def _plan(n, c, l_pad, itemsize, *, tile_l, tile_c_rows, num_buffers,
          has_target):
    """Generation-aware tiling plan.

    Regime routing: arithmetic intensity of the Gram is ~2*C/itemsize
    flops/byte, so the kernel is HBM-bound below the chip crossover
    (~240 v5e / ~650 v6e / ~310 v7x flops/byte) -> big TK, deeper buffering,
    optional bf16 streaming.  Above it (e.g. C=512) it is MXU-bound -> keep
    TK large and, on v7x with N == 1, split G rows across both TensorCores.
    """
    small_vmem = _vmem_capacity_bytes() <= 64 * _MIB
    f_budget = (4 if small_vmem else 20) * _MIB     # per streamed F buffer
    limit_cap = (48 if small_vmem else 100) * _MIB  # scoped-VMEM ceiling

    tk = _choose_tk(l_pad, c, itemsize, tile_l, f_budget)
    num_k = l_pad // tk

    # Row-panel split of G: keeps both v7x TensorCores busy when the batch
    # axis alone cannot (N == 1) and the layer is large enough to be MXU-bound.
    tr = c
    if tile_c_rows is not None:
        t = int(tile_c_rows)
        if c % t == 0 and (t == c or t % 8 == 0):
            tr = t
    elif n == 1 and c >= 256 and (c // 2) % 8 == 0:
        tr = c // 2
    num_panels = c // tr

    # Buffering depth: a third feature buffer is cheap on 128 MiB-VMEM chips
    # and hides DMA jitter on HBM-bound layers; pointless for tiny reductions.
    if num_buffers is None:
        num_buffers = 2 if small_vmem else 3
    num_buffers = int(num_buffers)
    if num_k < 3:
        num_buffers = 2

    vmem_limit = _vmem_limit_bytes(c, tr, tk, itemsize,
                                   num_buffers=num_buffers,
                                   has_target=has_target, cap=limit_cap)
    return tk, num_k, tr, num_panels, num_buffers, vmem_limit


# ----------------------------- Pallas kernels ------------------------------


def _gram_partial(f_rows, f_full):
    # NT contraction over the L axis on the MXU: (TR, TK) x (C, TK) -> (TR, C).
    # dot_general avoids materializing / relayouting an explicit transpose.
    return lax.dot_general(
        f_rows, f_full,
        dimension_numbers=(((1,), (1,)), ((), ())),
        preferred_element_type=jnp.float32)


def _gram_kernel(f_ref, g_ref, acc_ref, *, inv_norm, tr, num_panels):
    # f_ref: (1, C, TK), g_ref: (1, TR, C), acc_ref: (TR, C) f32 scratch
    k = pl.program_id(2)

    @pl.when(k == 0)
    def _():
        acc_ref[...] = jnp.zeros_like(acc_ref)

    f_full = f_ref[0]
    if num_panels == 1:
        f_rows = f_full
    else:
        row0 = pl.multiple_of(pl.program_id(1) * tr, tr)
        f_rows = f_ref[0, pl.ds(row0, tr), :]
    acc_ref[...] += _gram_partial(f_rows, f_full)

    @pl.when(k == pl.num_programs(2) - 1)
    def _():
        g_ref[0] = (acc_ref[...] * inv_norm).astype(g_ref.dtype)


def _gram_loss_kernel(f_ref, t_ref, g_ref, sse_ref, acc_ref, *,
                      inv_norm, tr, num_panels):
    # f_ref: (1, C, TK), t_ref: (1, C, C) f32, g_ref: (1, TR, C),
    # sse_ref: (1, 1, 128) lane-dense per-(batch, panel) SSE partial,
    # acc_ref: (TR, C) f32 scratch
    k = pl.program_id(2)

    @pl.when(k == 0)
    def _():
        acc_ref[...] = jnp.zeros_like(acc_ref)

    f_full = f_ref[0]
    if num_panels == 1:
        f_rows = f_full
        row0 = 0
    else:
        row0 = pl.multiple_of(pl.program_id(1) * tr, tr)
        f_rows = f_ref[0, pl.ds(row0, tr), :]
    acc_ref[...] += _gram_partial(f_rows, f_full)

    @pl.when(k == pl.num_programs(2) - 1)
    def _():
        g = acc_ref[...] * inv_norm
        g_ref[0] = g.astype(g_ref.dtype)
        if num_panels == 1:
            t_rows = t_ref[0]
        else:
            t_rows = t_ref[0, pl.ds(row0, tr), :]
        diff = g - t_rows
        sse = jnp.sum(diff * diff)
        # Broadcast across lanes: lane-dense store of the per-panel partial.
        sse_ref[...] = jnp.full(sse_ref.shape, sse, dtype=sse_ref.dtype)


# ------------------------------ JAX wrappers --------------------------------


def _prepare_features(x, stream_dtype):
    n, c, h, w = x.shape
    l = h * w
    f = x.reshape(n, c, l)
    if stream_dtype is not None:
        # Optional bf16 streaming: halves feature HBM traffic on mem-bound
        # layers; accumulation stays f32 in-kernel.
        f = f.astype(stream_dtype)
    l_pad = pl.cdiv(l, _LANE) * _LANE
    if l_pad != l:
        # Zero columns contribute nothing to F @ F^T but restore dense lanes,
        # exact grids and L-tiling for non-multiple-of-128 spatial sizes.
        f = jnp.pad(f, ((0, 0), (0, 0), (0, l_pad - l)))
    return f, l, l_pad


def gram_matrix(x, *, tile_l=None, tile_c_rows=None, num_buffers=None,
                stream_dtype=None):
    """Batched Gram matrix of NCHW input: (N, C, H, W) -> (N, C, C) f32."""
    n, c, h, w = x.shape
    f, l, l_pad = _prepare_features(x, stream_dtype)
    itemsize = f.dtype.itemsize
    tk, num_k, tr, num_panels, num_buffers, vmem_limit = _plan(
        n, c, l_pad, itemsize, tile_l=tile_l, tile_c_rows=tile_c_rows,
        num_buffers=num_buffers, has_target=False)
    inv_norm = 1.0 / float(c * l)  # ORIGINAL b*c*d from the PyTorch code
    f_kwargs = ({} if num_buffers == 2
                else {"pipeline_mode": pl.Buffered(num_buffers)})
    cost = pl.CostEstimate(
        flops=2 * n * c * c * l_pad,
        transcendentals=0,
        bytes_accessed=n * num_panels * c * l_pad * itemsize + n * c * c * 4)
    return pl.pallas_call(
        functools.partial(_gram_kernel, inv_norm=inv_norm, tr=tr,
                          num_panels=num_panels),
        out_shape=jax.ShapeDtypeStruct((n, c, c), jnp.float32),
        grid=(n, num_panels, num_k),
        in_specs=[pl.BlockSpec((1, c, tk), lambda i, r, k: (i, 0, k),
                               **f_kwargs)],
        out_specs=pl.BlockSpec((1, tr, c), lambda i, r, k: (i, r, 0)),
        scratch_shapes=[pltpu.VMEM((tr, c), jnp.float32)],
        compiler_params=pltpu.CompilerParams(
            dimension_semantics=("parallel", "parallel", "arbitrary"),
            vmem_limit_bytes=vmem_limit),
        cost_estimate=cost,
    )(f)


def gram_and_style_loss(x, target, weight, *, tile_l=None, tile_c_rows=None,
                        num_buffers=None, stream_dtype=None):
    """Returns (G, loss) where loss = weight * MSE(G, target)."""
    n, c, h, w = x.shape
    f, l, l_pad = _prepare_features(x, stream_dtype)
    itemsize = f.dtype.itemsize
    tk, num_k, tr, num_panels, num_buffers, vmem_limit = _plan(
        n, c, l_pad, itemsize, tile_l=tile_l, tile_c_rows=tile_c_rows,
        num_buffers=num_buffers, has_target=True)
    inv_norm = 1.0 / float(c * l)
    target = target.astype(jnp.float32)  # f32 diff bounds bf16 streaming error
    f_kwargs = ({} if num_buffers == 2
                else {"pipeline_mode": pl.Buffered(num_buffers)})
    cost = pl.CostEstimate(
        flops=2 * n * c * c * l_pad + 3 * n * c * c,
        transcendentals=0,
        bytes_accessed=(n * num_panels * c * l_pad * itemsize
                        + 2 * n * c * c * 4
                        + n * num_panels * _LANE * 4))
    g, sse = pl.pallas_call(
        functools.partial(_gram_loss_kernel, inv_norm=inv_norm, tr=tr,
                          num_panels=num_panels),
        out_shape=(
            jax.ShapeDtypeStruct((n, c, c), jnp.float32),
            jax.ShapeDtypeStruct((n * num_panels, 1, _LANE), jnp.float32),
        ),
        grid=(n, num_panels, num_k),
        in_specs=[
            pl.BlockSpec((1, c, tk), lambda i, r, k: (i, 0, k), **f_kwargs),
            # Target block index constant across r,k -> one DMA per batch elem.
            pl.BlockSpec((1, c, c), lambda i, r, k: (i, 0, 0)),
        ],
        out_specs=(
            pl.BlockSpec((1, tr, c), lambda i, r, k: (i, r, 0)),
            pl.BlockSpec((1, 1, _LANE),
                         lambda i, r, k: (i * num_panels + r, 0, 0)),
        ),
        scratch_shapes=[pltpu.VMEM((tr, c), jnp.float32)],
        compiler_params=pltpu.CompilerParams(
            dimension_semantics=("parallel", "parallel", "arbitrary"),
            vmem_limit_bytes=vmem_limit),
        cost_estimate=cost,
    )(f, target)
    # MSELoss = mean over all N*C*C elements; scale by style weight.
    loss = weight * jnp.sum(sse[:, 0, 0]) / float(n * c * c)
    return g, loss


class StyleLoss:
    """JAX/Pallas port of the PyTorch StyleLoss module (forward semantics)."""

    def __init__(self, weight):
        self.weight = float(weight)
        self.mode = "none"
        self.target = None
        self.G = None
        self.loss = None
        self.output = None
    # TODO(synk): .backward() (autograd of the loss) is not reimplemented here;
    # use jax.grad over gram_and_style_loss if gradients are needed.

    def set_mode(self, mode):
        self.mode = mode

    def forward(self, x):
        self.output = x  # mirrors input.clone(): forward returns the input
        if self.mode == "capture":
            self.target = gram_matrix(jax.lax.stop_gradient(x))
        elif self.mode == "loss":
            self.G, self.loss = gram_and_style_loss(x, self.target, self.weight)
        return self.output

    __call__ = forward


# --------------------------------- main -------------------------------------


def _gram_ref(x):
    n, c, h, w = x.shape
    f = x.reshape(n, c, h * w).astype(jnp.float32)
    return jnp.einsum("ncl,nml->ncm", f, f) / float(c * h * w)


if __name__ == "__main__":
    key = jax.random.PRNGKey(0)
    k_style, k_input, k_a, k_b, k_c = jax.random.split(key, 5)

    # --- Module-level test (matches the PyTorch usage pattern) --------------
    N, C, H, W = 2, 4, 16, 16
    x_style = jax.random.normal(k_style, (N, C, H, W), dtype=jnp.float32)
    x_input = jax.random.normal(k_input, (N, C, H, W), dtype=jnp.float32)

    weight = 5.0
    module = StyleLoss(weight)

    module.set_mode("capture")
    out_cap = module(x_style)
    jax.block_until_ready((out_cap, module.target))

    module.set_mode("loss")
    out_loss = module(x_input)
    jax.block_until_ready((out_loss, module.G, module.loss))

    tgt_ref = _gram_ref(x_style)
    g_ref = _gram_ref(x_input)
    loss_ref = weight * jnp.mean((g_ref - tgt_ref) ** 2)

    assert jnp.allclose(out_loss, x_input)  # forward returns the input (clone)
    assert jnp.allclose(module.target, tgt_ref, atol=1e-5, rtol=1e-5)
    assert jnp.allclose(module.G, g_ref, atol=1e-5, rtol=1e-5)
    assert jnp.allclose(module.loss, loss_ref, atol=1e-5, rtol=1e-5)

    # --- Unaligned-L path (zero-padded to a lane multiple in the wrapper) ---
    xa = jax.random.normal(k_a, (2, 8, 9, 9), dtype=jnp.float32)  # L=81 -> 128
    ta = _gram_ref(xa)
    ga = gram_matrix(xa)
    ga2, la = gram_and_style_loss(xa, ta, weight)
    jax.block_until_ready((ga, ga2, la))
    assert jnp.allclose(ga, ta, atol=1e-5, rtol=1e-5)
    assert jnp.allclose(ga2, ta, atol=1e-5, rtol=1e-5)
    assert jnp.allclose(la, 0.0, atol=1e-6)

    # --- Multi-step L reduction + deeper (triple) feature buffering ---------
    xb = jax.random.normal(k_b, (1, 16, 24, 24), dtype=jnp.float32)  # 576->640
    tb = _gram_ref(xb)
    gb = gram_matrix(xb, tile_l=128, num_buffers=3)
    jax.block_until_ready(gb)
    assert jnp.allclose(gb, tb, atol=1e-5, rtol=1e-5)

    # --- Row-panel split (keeps both v7x TensorCores busy when N == 1) ------
    xc = jax.random.normal(k_c, (1, 16, 16, 16), dtype=jnp.float32)
    tc = _gram_ref(xc)
    gc = gram_matrix(xc, tile_l=128, tile_c_rows=8)
    gc2, lc = gram_and_style_loss(xc, tc, weight, tile_l=128, tile_c_rows=8)
    jax.block_until_ready((gc, gc2, lc))
    assert jnp.allclose(gc, tc, atol=1e-5, rtol=1e-5)
    assert jnp.allclose(gc2, tc, atol=1e-5, rtol=1e-5)
    assert jnp.allclose(lc, 0.0, atol=1e-6)

    # --- Optional bf16 streaming path (f32 accumulation) --------------------
    gbf = gram_matrix(x_input, stream_dtype=jnp.bfloat16)
    jax.block_until_ready(gbf)
    assert jnp.allclose(gbf, g_ref, atol=1e-2, rtol=1e-2)

    print("KERNEL_OK")
</pallas_src>

<mosaic_0001>
module attributes {stable_mosaic.version = 11 : i64} {
  func.func @_gram_kernel(%arg0: i32, %arg1: i32, %arg2: i32, %arg3: memref<1x4x256xf32, #tpu.memory_space<vmem>>, %arg4: memref<1x4x4xf32, #tpu.memory_space<vmem>>, %arg5: memref<4x4xf32, #tpu.memory_space<vmem>>) attributes {dimension_semantics = [#tpu.dimension_semantics<parallel>, #tpu.dimension_semantics<parallel>, #tpu.dimension_semantics<arbitrary>], iteration_bounds = array<i64: 2, 1, 1>, scalar_prefetch = 0 : i64, scratch_operands = 1 : i64, tpu.core_type = #tpu.core_type<tc>, window_params = [{transform_indices = @transform_0, window_bounds = array<i64: 1, 4, 256>}, {transform_indices = @transform_1, window_bounds = array<i64: 1, 4, 4>}]} {
    %c0_i32 = arith.constant 0 : i32
    %0 = arith.cmpi eq, %arg2, %c0_i32 : i32
    %1 = arith.extui %0 : i1 to i32
    %c0_i32_0 = arith.constant 0 : i32
    %2 = arith.cmpi ne, %1, %c0_i32_0 : i32
    scf.if %2 {
      %cst_9 = arith.constant 0.000000e+00 : f32
      %12 = vector.broadcast %cst_9 : f32 to vector<4x4xf32>
      %c0_10 = arith.constant 0 : index
      %c0_11 = arith.constant 0 : index
      %13 = vector.load %arg5[%c0_10, %c0_11] : memref<4x4xf32, #tpu.memory_space<vmem>>, vector<4x4xf32>
      tpu.vector_store %arg5[%c0_10, %c0_11], %12 {strides = array<i32>} : memref<4x4xf32, #tpu.memory_space<vmem>>, vector<4x4xf32>,
    } else {
    }
    %c0 = arith.constant 0 : index
    %c0_1 = arith.constant 0 : index
    %c0_2 = arith.constant 0 : index
    %3 = vector.load %arg3[%c0, %c0_1, %c0_2] : memref<1x4x256xf32, #tpu.memory_space<vmem>>, vector<1x4x256xf32>
    %4 = vector.shape_cast %3 : vector<1x4x256xf32> to vector<4x256xf32>
    %c0_3 = arith.constant 0 : index
    %c0_4 = arith.constant 0 : index
    %5 = vector.load %arg5[%c0_3, %c0_4] : memref<4x4xf32, #tpu.memory_space<vmem>>, vector<4x4xf32>
    %cst = arith.constant dense<0.000000e+00> : vector<4x4xf32>
    %6 = tpu.matmul %4, %4, %cst {dimension_numbers = #tpu.dot_dimension_numbers<[1], [1], [0], [0], [0, 0, 1, 0], [], []>} : vector<4x256xf32>, vector<4x256xf32>, vector<4x4xf32> -> vector<4x4xf32>
    %7 = arith.addf %5, %6 : vector<4x4xf32>
    %c0_5 = arith.constant 0 : index
    %c0_6 = arith.constant 0 : index
    %8 = vector.load %arg5[%c0_5, %c0_6] : memref<4x4xf32, #tpu.memory_space<vmem>>, vector<4x4xf32>
    tpu.vector_store %arg5[%c0_5, %c0_6], %7 {strides = array<i32>} : memref<4x4xf32, #tpu.memory_space<vmem>>, vector<4x4xf32>,
    %c0_i32_7 = arith.constant 0 : i32
    %9 = arith.cmpi eq, %arg2, %c0_i32_7 : i32
    %10 = arith.extui %9 : i1 to i32
    %c0_i32_8 = arith.constant 0 : i32
    %11 = arith.cmpi ne, %10, %c0_i32_8 : i32
    scf.if %11 {
      %c0_9 = arith.constant 0 : index
      %c0_10 = arith.constant 0 : index
      %12 = vector.load %arg5[%c0_9, %c0_10] : memref<4x4xf32, #tpu.memory_space<vmem>>, vector<4x4xf32>
      %cst_11 = arith.constant 9.765625E-4 : f32
      %13 = vector.broadcast %cst_11 : f32 to vector<4x4xf32>
      %14 = arith.mulf %12, %13 : vector<4x4xf32>
      %c0_12 = arith.constant 0 : index
      %c0_13 = arith.constant 0 : index
      %c0_14 = arith.constant 0 : index
      %15 = vector.load %arg4[%c0_12, %c0_13, %c0_14] : memref<1x4x4xf32, #tpu.memory_space<vmem>>, vector<1x4x4xf32>
      %16 = vector.shape_cast %15 : vector<1x4x4xf32> to vector<4x4xf32>
      %17 = vector.shape_cast %14 : vector<4x4xf32> to vector<1x4x4xf32>
      tpu.vector_store %arg4[%c0_12, %c0_13, %c0_14], %17 {strides = array<i32>} : memref<1x4x4xf32, #tpu.memory_space<vmem>>, vector<1x4x4xf32>,
    } else {
    }
    return
  }
  func.func @transform_0(%arg0: i32, %arg1: i32, %arg2: i32) -> (i32, i32, i32) {
    %c0_i32 = arith.constant 0 : i32
    %c0_i32_0 = arith.constant 0 : i32
    return %arg0, %c0_i32, %arg2 : i32, i32, i32
  }
  func.func @transform_1(%arg0: i32, %arg1: i32, %arg2: i32) -> (i32, i32, i32) {
    %c0_i32 = arith.constant 0 : i32
    %c0_i32_0 = arith.constant 0 : i32
    return %arg0, %arg1, %c0_i32 : i32, i32, i32
  }
}

</mosaic_0001>

<llo_original>
// kernel: tpu_custom_call.1
$region0: #{tpu_custom_call.1}
  #allocation0 [shape = 'u32[]', space=smem, size = 0x4, offset = 0x4, fixed_abs, tag = 'smem constant byte address 0x4 - core index']
  #allocation1 [shape = 'u32[144,128]{1,0:T(1,128)}', space=vmem, size = 0x12000, scoped, tag = 'internal scratch']
  #allocation2 [shape = 'f32[4,4]{1,0:T(4,128)}', space=vmem, size = 0x800, scoped, tag = 'scratch operand']
  %s0 = inlined_call_operand.hbm [shape: f32[2,4,256], index: 0, kind: input, shape index: {}]
  %s1 = inlined_call_operand.hbm [shape: f32[2,4,4], index: 1, kind: output, shape index: {}]
  %s2 = sld [smem:[#allocation0]]
  $region49: #{tpu_custom_call.1} parent=0
    _
  %s4 = ssub.s32 1, %s2
  %s5 = scalar_select 0, %s4, %s2
  $region1: #{tpu_custom_call.1} parent=0
    #allocation3 [shape = 'u8[8192]{0}', space=vmem, size = 0x2000, scoped, tag = 'input window, operand 0']
    #allocation4 [shape = 's32[2]{0}', space=sflag, size = 0x8, scoped, tag = 'scoped memory for tpu_custom_call.1']
    #allocation5 [shape = 's32[2]{0}', space=sflag, size = 0x8, scoped, tag = 'scoped memory for tpu_custom_call.1']
    #allocation6 [shape = 'u8[4096]{0}', space=vmem, size = 0x1000, scoped, tag = 'output window, operand 0']
    %6 = vsyncpa [#allocation4], 0
    %s7 = scalar_lea.sflag [#allocation4], 1
    %8 = vsyncpa %s7, 0
    %9 = vsyncpa [#allocation5], 0
    %s10 = scalar_lea.sflag [#allocation5], 1
    %11 = vsyncpa %s10, 0
    loop: start=0, step=1, limit=4
    $region2: #{tpu_custom_call.1} parent=1 // loop_pre_header
      _
    $region3: #{tpu_custom_call.1} parent=1 // loop_header
      %s13 = sphi 0, %s17
      %p14 = scmp.ge.s32.totalorder %s13, 4
      %s20 = sphi 0, %s39
      %s21 = sphi 0, %s35
      %s22 = sphi 0, %s31
      %s23 = sphi 0, %s20
      %s24 = sphi 0, %s21
      %s25 = sphi 0, %s22
      %s26 = sphi 0, %s23
      %s27 = sphi 0, %s24
      %s28 = sphi 0, %s25
      %s44 = sphi 0, %s46
      %s47 = sphi 0, %s44
      %s48 = sphi 0, %s47
      %s64 = sphi 0, %s48
      %s72 = sphi 0, %s74
      %s75 = sphi 0, %s72
      %s76 = sphi 0, %s75
      %s92 = sphi 0, %s76
    $region4: #{tpu_custom_call.1} parent=1 // loop_header_branch
      %16 = sbr.rel (%p14) target = $region8
    $region5: #{tpu_custom_call.1} parent=1 // loop_body
      %s18 = ssub.s32 %s13, 1
      %s19 = ssub.s32 %s13, 2
      %s29 = sadd.s32 1, %s22
      %p30 = scmp.ge.s32.totalorder %s29, 1
      %s31 = scalar_select %p30, 0, %s29
      %s32 = sadd.s32 1, %s21
      %s33 = scalar_select %p30, %s32, %s21
      %p34 = scmp.ge.s32.totalorder %s33, 1
      %s35 = scalar_select %p34, 0, %s33
      %s36 = sadd.s32 1, %s20
      %s37 = scalar_select %p34, %s36, %s20
      %p38 = scmp.ge.s32.totalorder %s37, 2
      %s39 = scalar_select %p38, 0, %s37
      %s40 = ssub.s32 %s20, %s39
      %s41 = ssub.s32 %s22, %s31
      %s42 = sor.u32 %s40, %s41
      %p43 = scmp.eq.s32.totalorder %s42, 0
      %s45 = sadd.s32 %s44, 1
      %s46 = scalar_select %p43, %s44, %s45
      %p49 = pneg %p43
      %p50 = scmp.eq.s32.totalorder %s13, 1
      %p51 = por %p49, %p50
      %p52 = scmp.ne.s32.totalorder %s44, %s47
      %p53 = scmp.eq.s32.totalorder %s13, 0
      %p54 = por %p52, %p53
      %p55 = scmp.ne.s32.totalorder %s44, %s47
      %p56 = scmp.eq.s32.totalorder %s18, 1
      %p57 = por %p55, %p56
      %p58 = scmp.ne.s32.totalorder %s47, %s48
      %p59 = scmp.eq.s32.totalorder %s18, 0
      %p60 = por %p58, %p59
      %p61 = scmp.ne.s32.totalorder %s47, %s48
      %p62 = scmp.eq.s32.totalorder %s19, 1
      %p63 = por %p61, %p62
      %p65 = scmp.ne.s32.totalorder %s48, %s64
      %p66 = scmp.eq.s32.totalorder %s19, 0
      %p67 = por %p65, %p66
      %s68 = ssub.s32 %s20, %s39
      %s69 = ssub.s32 %s21, %s35
      %s70 = sor.u32 %s68, %s69
      %p71 = scmp.eq.s32.totalorder %s70, 0
      %s73 = sadd.s32 %s72, 1
      %s74 = scalar_select %p71, %s72, %s73
      %p77 = pneg %p71
      %p78 = scmp.eq.s32.totalorder %s13, 1
      %p79 = por %p77, %p78
      %p80 = scmp.ne.s32.totalorder %s72, %s75
      %p81 = scmp.eq.s32.totalorder %s13, 0
      %p82 = por %p80, %p81
      %p83 = scmp.ne.s32.totalorder %s72, %s75
      %p84 = scmp.eq.s32.totalorder %s18, 1
      %p85 = por %p83, %p84
      %p86 = scmp.ne.s32.totalorder %s75, %s76
      %p87 = scmp.eq.s32.totalorder %s18, 0
      %p88 = por %p86, %p87
      %p89 = scmp.ne.s32.totalorder %s75, %s76
      %p90 = scmp.eq.s32.totalorder %s19, 1
      %p91 = por %p89, %p90
      %p93 = scmp.ne.s32.totalorder %s76, %s92
      %p94 = scmp.eq.s32.totalorder %s19, 0
      %p95 = por %p93, %p94
      %p96 = scmp.le.s32.totalorder 1, %s13
      %p97 = scmp.lt.s32.totalorder %s13, 3
      %p98 = pnand %p96, %p97
      %p99 = pneg %p98
      // Predicated region
      $region9: #{tpu_custom_call.1} parent=5 // pred_check
        _
      $region10: #{tpu_custom_call.1} parent=5 // pred_check_branch
        %101 = sbr.rel (%p98) target = $region12
      $region11: #{tpu_custom_call.1} parent=5 // pred_region
        %s102 = ssub.s32 %s13, 1
      $region12: #{tpu_custom_call.1} parent=5 // pred_fallthru
        _
      %p103 = scmp.lt.s32.totalorder %s13, 2
      // Predicated region
      $region13: #{tpu_custom_call.1} parent=5 // pred_check
        %p104 = pneg %p103
      $region14: #{tpu_custom_call.1} parent=5 // pred_check_branch
        %106 = sbr.rel (%p104) target = $region16
      $region15: #{tpu_custom_call.1} parent=5 // pred_region
        // Predicated region
        $region17: #{tpu_custom_call.1} parent=15 // pred_check
          %p107 = pneg %p54
        $region18: #{tpu_custom_call.1} parent=15 // pred_check_branch
          %109 = sbr.rel (%p107) target = $region20
        $region19: #{tpu_custom_call.1} parent=15 // pred_region
          %s110 = sand.u32 %s44, 1
          %s111 = scalar_lea.sflag [#allocation4], %s110
          %s112 = sand.u32 %s44, 1
          %s113 = smul.addr %s112, 8
          %s114 = scalar_lea.vmem [#allocation3], %s113
          %s115 = smul.u32 2, %s22
          %s117 = ssub.s32 128, 128
          %118 = vsyncadd %s111, %s117
          %s119 = smul.addr %s20, 2
          %s120 = sadd.s32 %s115, %s119
          %s121 = smul.addr %s120, 64
          %s122 = scalar_lea.hbm %s0, %s121
          %s124 = sshll.u32 %s114, 4
          %s125 = int_to_ptr.vmem [resolvable:$true] %s124
          %127 = dma.hbm_to_vmem [thread:$0]  %s122, 128, %s125, %s111
        $region20: #{tpu_custom_call.1} parent=15 // pred_fallthru
          _
      $region16: #{tpu_custom_call.1} parent=5 // pred_fallthru
        _
      %p128 = scmp.le.s32.totalorder 1, %s13
      %p129 = scmp.lt.s32.totalorder %s13, 3
      %p130 = pnand %p128, %p129
      %p131 = pneg %p130
      // Predicated region
      $region21: #{tpu_custom_call.1} parent=5 // pred_check
        _
      $region22: #{tpu_custom_call.1} parent=5 // pred_check_branch
        %133 = sbr.rel (%p130) target = $region24
      $region23: #{tpu_custom_call.1} parent=5 // pred_region
        %s134 = ssub.s32 %s13, 1
        %s135 = sand.u32 %s47, 1
        %s136 = scalar_lea.sflag [#allocation4], %s135
        %s137 = sand.u32 %s47, 1
        %s138 = smul.addr %s137, 8
        %s139 = scalar_lea.vmem [#allocation3], %s138
        // Predicated region
        $region25: #{tpu_custom_call.1} parent=23 // pred_check
          %p140 = pneg %p60
        $region26: #{tpu_custom_call.1} parent=23 // pred_check_branch
          %142 = sbr.rel (%p140) target = $region28
        $region27: #{tpu_custom_call.1} parent=23 // pred_region
          %143 = dma.done %s136, 128
        $region28: #{tpu_custom_call.1} parent=23 // pred_fallthru
          _
        %s144 = sand.u32 %s47, 1
        %s145 = scalar_lea.sflag [#allocation4], %s144
        %s146 = sand.u32 %s47, 1
        %s147 = smul.addr %s146, 8
        %s148 = scalar_lea.vmem [#allocation3], %s147
        %p149 = pneg %p60
        %p150 = pneg %p57
        %p151 = pneg %p88
        %p152 = pneg %p85
        %s153 = sand.u32 %s75, 1
        %s154 = scalar_lea.sflag [#allocation5], %s153
        %s155 = sand.u32 %s75, 1
        %s156 = smul.addr %s155, 4
        %s157 = scalar_lea.vmem [#allocation6], %s156
        %s158 = smul.u32 2, %s25
        %p159 = scmp.eq.s32.totalorder %s25, 0
        // Predicated region
        $region29: #{tpu_custom_call.1} parent=23 // pred_check
          %p160 = pneg %p159
        $region30: #{tpu_custom_call.1} parent=23 // pred_check_branch
          %162 = sbr.rel (%p160) target = $region32
        $region31: #{tpu_custom_call.1} parent=23 // pred_region
          %vm163 = vcmask 27648
          %164 = vst.msk [vmem:[#allocation2] sm:$0xf] %vm163, 0.0
        $region32: #{tpu_custom_call.1} parent=23 // pred_fallthru
          _
        %v165 = vld [vmem:[%s139] sm:$0xff]
        %v166 = vld [vmem:[#allocation2] sm:$0xf]
        %v168 = vcombine.high %v165, %v165
        %170 = vmatprep.subr.mxu0 0.0
        %171 = vmatpush1.xpose.msra.mxu0 0.0
        %172 = vmatprep.subr.mxu0 0.0
        %173 = vmatpush1.xpose.msra.mxu0 0.0
        %174 = vmatprep.subr.mxu0 0.0
        %175 = vmatpush1.xpose.msra.mxu0 0.0
        %176 = vmatprep.subr.mxu0 0.0
        %177 = vmatpush1.xpose.msra.mxu0 0.0
        %178 = vmatprep.subr.mxu0 0.0
        %179 = vmatpush1.xpose.msra.mxu0 0.0
        %180 = vmatprep.subr.mxu0 0.0
        %181 = vmatpush1.xpose.msra.mxu0 0.0
        %182 = vmatprep.subr.mxu0 0.0
        %183 = vmatpush1.xpose.msra.mxu0 0.0
        %184 = vmatprep.subr.mxu0 0.0
        %185 = vmatpush1.xpose.msra.mxu0 0.0
        %186 = vmatprep.subr.mxu0 0.0
        %187 = vmatpush1.xpose.msra.mxu0 0.0
        %188 = vmatprep.subr.mxu0 0.0
        %189 = vmatpush1.xpose.msra.mxu0 0.0
        %190 = vmatprep.subr.mxu0 0.0
        %191 = vmatpush1.xpose.msra.mxu0 0.0
        %192 = vmatprep.subr.mxu0 0.0
        %193 = vmatpush1.xpose.msra.mxu0 0.0
        %194 = vmatprep.subr.mxu0 0.0
        %195 = vmatpush1.xpose.msra.mxu0 0.0
        %196 = vmatprep.subr.mxu0 0.0
        %197 = vmatpush1.xpose.msra.mxu0 0.0
        %198 = vmatprep.subr.mxu0 0.0
        %199 = vmatpush1.xpose.msra.mxu0 0.0
        %200 = vmatprep.subr.mxu0 %v168
        %201 = vmatpush1.xpose.msra.mxu0 %v165
        %202 = vmatprep.subr.mxu0 0.0
        %203 = vmatpush2.xpose.msra.mxu0 0.0
        %204 = vmatprep.subr.mxu0 0.0
        %205 = vmatpush2.xpose.msra.mxu0 0.0
        %206 = vmatprep.subr.mxu0 0.0
        %207 = vmatpush2.xpose.msra.mxu0 0.0
        %208 = vmatprep.subr.mxu0 0.0
        %209 = vmatpush2.xpose.msra.mxu0 0.0
        %210 = vmatprep.subr.mxu0 0.0
        %211 = vmatpush2.xpose.msra.mxu0 0.0
        %212 = vmatprep.subr.mxu0 0.0
        %213 = vmatpush2.xpose.msra.mxu0 0.0
        %214 = vmatprep.subr.mxu0 0.0
        %215 = vmatpush2.xpose.msra.mxu0 0.0
        %216 = vmatprep.subr.mxu0 0.0
        %217 = vmatpush2.xpose.msra.mxu0 0.0
        %218 = vmatprep.subr.mxu0 0.0
        %219 = vmatpush2.xpose.msra.mxu0 0.0
        %220 = vmatprep.subr.mxu0 0.0
        %221 = vmatpush2.xpose.msra.mxu0 0.0
        %222 = vmatprep.subr.mxu0 0.0
        %223 = vmatpush2.xpose.msra.mxu0 0.0
        %224 = vmatprep.subr.mxu0 0.0
        %225 = vmatpush2.xpose.msra.mxu0 0.0
        %226 = vmatprep.subr.mxu0 0.0
        %227 = vmatpush2.xpose.msra.mxu0 0.0
        %228 = vmatprep.subr.mxu0 0.0
        %229 = vmatpush2.xpose.msra.mxu0 0.0
        %230 = vmatprep.subr.mxu0 0.0
        %231 = vmatpush2.xpose.msra.mxu0 0.0
        %232 = vmatprep.subr.mxu0 0.0
        %233 = vmatpush2.xpose.msra.mxu0 0.0
        %234 = vmatprep.mubr.f32.mxu0 %v168
        %235 = vmatmul.mubr.f32.gmra.mxu0 %v165
        %v236 = vpop.f32.mrf.mxu0
        %v237 = vadd.f32 0.0, %v236
        %v238 = vpop.f32.mrf.mxu0
        %239 = vdwg.mxu0
        %v240 = vadd.f32 %v166, %v237
        %vm241 = vcmask 27648
        %242 = vst.msk [vmem:[#allocation2] sm:$0xf] %vm241, %v240
        // Predicated region
        $region33: #{tpu_custom_call.1} parent=23 // pred_check
          %p243 = pneg %p159
        $region34: #{tpu_custom_call.1} parent=23 // pred_check_branch
          %245 = sbr.rel (%p243) target = $region36
        $region35: #{tpu_custom_call.1} parent=23 // pred_region
          %v246 = vld [vmem:[#allocation2] sm:$0xf]
          %v247 = vmul.f32 %v246, 0.0009765625
          %248 = vst.msk [vmem:[%s157] sm:$0xf] %vm241, %v247
        $region36: #{tpu_custom_call.1} parent=23 // pred_fallthru
          _
        %s249 = sand.u32 %s75, 1
        %s250 = scalar_lea.sflag [#allocation5], %s249
        %s251 = sand.u32 %s75, 1
        %s252 = smul.addr %s251, 4
        %s253 = scalar_lea.vmem [#allocation6], %s252
        // Predicated region
        $region37: #{tpu_custom_call.1} parent=23 // pred_check
          %p254 = pneg %p85
        $region38: #{tpu_custom_call.1} parent=23 // pred_check_branch
          %256 = sbr.rel (%p254) target = $region40
        $region39: #{tpu_custom_call.1} parent=23 // pred_region
          %s258 = ssub.s32 64, 64
          %259 = vsyncadd %s250, %s258
          %s260 = sadd.s32 %s24, %s23
          %s261 = smul.addr %s260, 64
          %s262 = scalar_lea.hbm %s1, %s261
          %s264 = sshll.u32 %s253, 4
          %s265 = int_to_ptr.vmem [resolvable:$true] %s264
          %267 = dma.vmem_to_hbm [thread:$0]  %s265, 64, %s262, %s250
        $region40: #{tpu_custom_call.1} parent=23 // pred_fallthru
          _
      $region24: #{tpu_custom_call.1} parent=5 // pred_fallthru
        _
      %p268 = scmp.le.s32.totalorder 2, %s13
      // Predicated region
      $region41: #{tpu_custom_call.1} parent=5 // pred_check
        %p269 = pneg %p268
      $region42: #{tpu_custom_call.1} parent=5 // pred_check_branch
        %271 = sbr.rel (%p269) target = $region44
      $region43: #{tpu_custom_call.1} parent=5 // pred_region
        %s272 = ssub.s32 %s13, 2
        // Predicated region
        $region45: #{tpu_custom_call.1} parent=43 // pred_check
          %p273 = pneg %p91
        $region46: #{tpu_custom_call.1} parent=43 // pred_check_branch
          %275 = sbr.rel (%p273) target = $region48
        $region47: #{tpu_custom_call.1} parent=43 // pred_region
          %s276 = sand.u32 %s76, 1
          %s277 = scalar_lea.sflag [#allocation5], %s276
          %s278 = sand.u32 %s76, 1
          %s279 = smul.addr %s278, 4
          %s280 = scalar_lea.vmem [#allocation6], %s279
          %281 = dma.done %s277, 64
        $region48: #{tpu_custom_call.1} parent=43 // pred_fallthru
          _
      $region44: #{tpu_custom_call.1} parent=5 // pred_fallthru
        _
    $region6: #{tpu_custom_call.1} parent=1 // loop_footer
      %s17 = sadd.s32 1, %s13
    $region7: #{tpu_custom_call.1} parent=1 // loop_footer_branch
      %12 = sbr.rel target = $region3
    $region8: #{tpu_custom_call.1} parent=1 // loop_exit
      _
    %282 = vsyncpa [#allocation4], 1
    %s283 = scalar_lea.sflag [#allocation4], 1
    %284 = vsyncpa %s283, 1
    %285 = vsyncpa [#allocation5], 1
    %s286 = scalar_lea.sflag [#allocation5], 1
    %287 = vsyncpa %s286, 1

</llo_original>
